<compile_context>
chip_gen: v7x
topology: tpu7x:2x2x1
jax: 0.10.0
libtpu: 0.0.40
codegen_flags: <defaults>
</compile_context>

<pallas_src>
from functools import partial

import jax
import jax.numpy as jnp
from jax.experimental import pallas as pl
from jax.experimental.pallas import tpu as pltpu

MARGIN_MSE_SCALE = 1.0  # self.scales['margin_mse'] = 1


def criterion_kernel(p_ref, pred_pos_ref, pred_neg_ref, label_ref, plogp_ref,
                     *rest, n_teachers):
    """rest = (*teacher_refs, student_ref, map_ref, loss_ref, m_sc, l_sc, dot_sc)."""
    teacher_refs = rest[:n_teachers]
    student_ref, map_ref, loss_ref = rest[n_teachers:n_teachers + 3]
    m_sc, l_sc, dot_sc = rest[n_teachers + 3:]

    k = pl.program_id(0)
    nk = pl.num_programs(0)

    # ---------------- init running accumulators ----------------
    @pl.when(k == 0)
    def _init():
        m_sc[...] = jnp.full(m_sc.shape, -jnp.inf, dtype=jnp.float32)
        l_sc[...] = jnp.zeros(l_sc.shape, dtype=jnp.float32)
        dot_sc[...] = jnp.zeros(dot_sc.shape, dtype=jnp.float32)

    # ---------------- per-tile accumulation ---------------------
    p = p_ref[...]  # (1, TV) f32; zeros at masked vocab slots -> contribute 0 to <p, x>
    for t, x_ref in enumerate(teacher_refs):
        x = x_ref[...].astype(jnp.float32)                      # (B, TV), bf16 -> f32 per tile
        m_old = m_sc[t]                                         # (B, 1)
        tile_max = jnp.max(x, axis=-1, keepdims=True)           # (B, 1)
        m_new = jnp.maximum(m_old, tile_max)
        l_sc[t] = (l_sc[t] * jnp.exp(m_old - m_new)
                   + jnp.sum(jnp.exp(x - m_new), axis=-1, keepdims=True))
        dot_sc[t] = dot_sc[t] + jnp.sum(x * p, axis=-1, keepdims=True)
        m_sc[t] = m_new

    # ---------------- finalize on the last tile ------------------
    @pl.when(k == nk - 1)
    def _finalize():
        # MarginMSE (student loss); (1, B) score inputs are resident across the grid.
        diff = pred_pos_ref[...] - pred_neg_ref[...]
        mse = jnp.mean((diff - label_ref[...]) ** 2) * MARGIN_MSE_SCALE

        plogp_sum = plogp_ref[0, 0]                             # constant sum_v p*log p
        batch = teacher_refs[0].shape[0]
        inv_b = jnp.float32(1.0 / batch)

        ce = jnp.float32(0.0)
        for t in range(n_teachers):
            lse = m_sc[t] + jnp.log(l_sc[t])                    # (B, 1) logsumexp per row
            ce = ce + jnp.sum(dot_sc[t] - lse) * inv_b          # sum_b(<p,x_b> - lse_b)/B
        map_loss = n_teachers * plogp_sum - ce

        student_ref[0, 0] = mse
        map_ref[0, 0] = map_loss
        loss_ref[0, 0] = mse + map_loss


def softmax_idf2mlm_sum_criterion(pred_pos, pred_neg, label, idf_masked,
                                  teacher_query, teacher_pos, teacher_neg,
                                  target="pd", tile_v=None):
    """Wrapper mirroring SoftmaxIDF2MLMSumCriterion.forward (norm_method='softmax')."""
    # Target flags exactly as in the module: pd defaults to True, substring checks enable the rest.
    targets = {"q": ("q" in target), "pd": True, "nd": ("nd" in target)}
    if "pd" in target:
        targets["pd"] = True

    B = int(pred_pos.shape[0])
    V = int(idf_masked.shape[0])

    # --- idf target distribution (fixed module buffer): compute once, outside the kernel ---
    p = jax.nn.softmax(idf_masked.astype(jnp.float32))          # zeros where idf was masked -inf
    plogp_sum = jnp.sum(jnp.where(p > 0.0,
                                  p * jnp.log(jnp.where(p > 0.0, p, 1.0)),
                                  0.0))                         # sum_v p*log p (xlogy convention)

    # --- enabled teachers only (disabled ones are never DMA'd) ---
    teacher_list = []
    if targets["pd"]:
        teacher_list.append(teacher_pos)
    if targets["nd"]:
        teacher_list.append(teacher_neg)
    if targets["q"]:
        teacher_list.append(teacher_query)
    n_teachers = len(teacher_list)                              # >= 1 (pd always on)

    # --- vocab-tile selection ---
    if tile_v is None:
        tile_v = V
        for cand in (4096, 2048, 1024, 512, 256, 128):
            if V % cand == 0:
                tile_v = cand
                break
    if V % tile_v != 0:
        tile_v = V  # fallback: single tile  # TODO(synk): pad V for non-multiple tile sizes
    num_tiles = V // tile_v

    # --- VMEM budget: only raise the scoped limit when the tiles actually need it ---
    itemsize = jnp.dtype(teacher_list[0].dtype).itemsize
    vmem_need = (n_teachers * 2 * B * tile_v * itemsize   # double-buffered teacher tiles
                 + 2 * tile_v * 4                          # double-buffered p tile
                 + 3 * n_teachers * B * 4                  # scratch accumulators
                 + 3 * 2 * B * 4)                          # resident (1, B) score inputs
    vmem_limit = None
    if vmem_need * 2 > (32 << 20):
        vmem_limit = int(min(vmem_need * 2, 64 << 20))

    teacher_specs = [pl.BlockSpec((B, tile_v), lambda k: (0, k)) for _ in teacher_list]
    in_specs = [
        pl.BlockSpec((1, tile_v), lambda k: (0, k)),            # p tile (idf softmax)
        pl.BlockSpec((1, B), lambda k: (0, 0)),                 # pred_pos (resident)
        pl.BlockSpec((1, B), lambda k: (0, 0)),                 # pred_neg (resident)
        pl.BlockSpec((1, B), lambda k: (0, 0)),                 # label    (resident)
        pl.BlockSpec(memory_space=pltpu.MemorySpace.SMEM),      # sum_v p*log p scalar
    ] + teacher_specs

    out_shapes = (jax.ShapeDtypeStruct((1, 1), jnp.float32),) * 3
    out_specs = (pl.BlockSpec(memory_space=pltpu.MemorySpace.SMEM),) * 3

    student, map_loss, loss = pl.pallas_call(
        partial(criterion_kernel, n_teachers=n_teachers),
        out_shape=out_shapes,
        grid=(num_tiles,),
        in_specs=in_specs,
        out_specs=out_specs,
        scratch_shapes=[
            pltpu.VMEM((n_teachers, B, 1), jnp.float32),        # running max per row
            pltpu.VMEM((n_teachers, B, 1), jnp.float32),        # running sum-exp per row
            pltpu.VMEM((n_teachers, B, 1), jnp.float32),        # running <p, x_b> per row
        ],
        compiler_params=pltpu.CompilerParams(
            dimension_semantics=("arbitrary",),                 # reduction over vocab tiles
            vmem_limit_bytes=vmem_limit),
    )(
        p.reshape(1, V),
        pred_pos.reshape(1, B).astype(jnp.float32),
        pred_neg.reshape(1, B).astype(jnp.float32),
        label.reshape(1, B).astype(jnp.float32),
        plogp_sum.reshape(1, 1),
        *teacher_list,                                          # native dtype (bf16 ok)
    )
    return {"student_loss": student[0, 0],
            "map_loss": map_loss[0, 0],
            "loss": loss[0, 0]}


def _reference(pred_pos, pred_neg, label, idf_masked, tq, tp, tn, target="q_pd_nd"):
    """Pure-JAX reference of the PyTorch forward (f32 math on the same inputs)."""
    targets = {"q": ("q" in target), "pd": True, "nd": ("nd" in target)}
    mse = jnp.mean(((pred_pos - pred_neg) - label) ** 2) * MARGIN_MSE_SCALE
    p = jax.nn.softmax(idf_masked.astype(jnp.float32))
    logp = jnp.where(p > 0, jnp.log(jnp.where(p > 0, p, 1.0)), 0.0)

    def kl(x):
        x = x.astype(jnp.float32)
        logq = jax.nn.log_softmax(x, axis=-1)
        return jnp.sum(jnp.where(p > 0, p * (logp - logq), 0.0)) / x.shape[0]

    dada = 0.0
    if targets["pd"]:
        dada = dada + kl(tp)
    if targets["nd"]:
        dada = dada + kl(tn)
    if targets["q"]:
        dada = dada + kl(tq)
    return {"student_loss": mse, "map_loss": dada, "loss": mse + dada}


if __name__ == "__main__":
    key = jax.random.PRNGKey(0)
    B, V = 2, 512  # small synthetic batch / vocab; tile_v=128 -> 4 pipelined grid steps
    k = jax.random.split(key, 8)

    pred_pos = jax.random.normal(k[0], (B,), jnp.float32) * 2.0 + 3.0
    pred_neg = jax.random.normal(k[1], (B,), jnp.float32) * 2.0
    label = jax.random.normal(k[2], (B,), jnp.float32) * 2.0 + 2.0  # teacher margin

    # Teacher MLM logits kept in bf16 (native dtype) -> streamed from HBM as bf16,
    # upcast to f32 per tile inside the kernel.
    teacher_query = (jax.random.normal(k[3], (B, V), jnp.float32)).astype(jnp.bfloat16)
    teacher_pos = (jax.random.normal(k[4], (B, V), jnp.float32)).astype(jnp.bfloat16)
    teacher_neg = (jax.random.normal(k[5], (B, V), jnp.float32)).astype(jnp.bfloat16)

    # Deterministic synthetic idf (stands in for json.load(idf_path)); ~10% exact zeros,
    # which mask_zero_2_neg_inf turns into -inf before the softmax normalizer.
    idf_raw = jnp.where(jax.random.uniform(k[6], (V,)) < 0.1,
                        0.0,
                        jax.random.uniform(k[7], (V,)) * 5.0).astype(jnp.float32)
    idf_masked = jnp.where(idf_raw == 0.0, -jnp.inf, idf_raw)

    losses = softmax_idf2mlm_sum_criterion(
        pred_pos, pred_neg, label, idf_masked,
        teacher_query, teacher_pos, teacher_neg,
        target="q_pd_nd", tile_v=128)
    losses = jax.block_until_ready(losses)

    ref = _reference(pred_pos, pred_neg, label, idf_masked,
                     teacher_query, teacher_pos, teacher_neg, target="q_pd_nd")
    for name in ("student_loss", "map_loss", "loss"):
        assert jnp.allclose(losses[name], ref[name], rtol=1e-4, atol=1e-5), (
            name, losses[name], ref[name])

    print("KERNEL_OK")
</pallas_src>

<mosaic_0001>
module attributes {stable_mosaic.version = 11 : i64} {
  func.func @criterion_kernel(%arg0: i32, %arg1: memref<1x128xf32, #tpu.memory_space<vmem>>, %arg2: memref<1x2xf32, #tpu.memory_space<vmem>>, %arg3: memref<1x2xf32, #tpu.memory_space<vmem>>, %arg4: memref<1x2xf32, #tpu.memory_space<vmem>>, %arg5: memref<1x1xf32, #tpu.memory_space<smem>>, %arg6: memref<2x128xbf16, #tpu.memory_space<vmem>>, %arg7: memref<2x128xbf16, #tpu.memory_space<vmem>>, %arg8: memref<2x128xbf16, #tpu.memory_space<vmem>>, %arg9: memref<1x1xf32, #tpu.memory_space<smem>>, %arg10: memref<1x1xf32, #tpu.memory_space<smem>>, %arg11: memref<1x1xf32, #tpu.memory_space<smem>>, %arg12: memref<3x2x1xf32, #tpu.memory_space<vmem>>, %arg13: memref<3x2x1xf32, #tpu.memory_space<vmem>>, %arg14: memref<3x2x1xf32, #tpu.memory_space<vmem>>) attributes {dimension_semantics = [#tpu.dimension_semantics<arbitrary>], iteration_bounds = array<i64: 4>, scalar_prefetch = 0 : i64, scratch_operands = 3 : i64, tpu.core_type = #tpu.core_type<tc>, window_params = [{transform_indices = @transform_0, window_bounds = array<i64: 1, 128>}, {pipeline_mode = #tpu.pipeline_mode<synchronous>, transform_indices = @transform_1, window_bounds = array<i64: 1, 2>}, {pipeline_mode = #tpu.pipeline_mode<synchronous>, transform_indices = @transform_2, window_bounds = array<i64: 1, 2>}, {pipeline_mode = #tpu.pipeline_mode<synchronous>, transform_indices = @transform_3, window_bounds = array<i64: 1, 2>}, {transform_indices = @transform_4, window_bounds = array<i64: 1, 1>}, {transform_indices = @transform_5, window_bounds = array<i64: 2, 128>}, {transform_indices = @transform_6, window_bounds = array<i64: 2, 128>}, {transform_indices = @transform_7, window_bounds = array<i64: 2, 128>}, {transform_indices = @transform_8, window_bounds = array<i64: 1, 1>}, {transform_indices = @transform_9, window_bounds = array<i64: 1, 1>}, {transform_indices = @transform_10, window_bounds = array<i64: 1, 1>}]} {
    %c0_i32 = arith.constant 0 : i32
    %0 = arith.cmpi eq, %arg0, %c0_i32 : i32
    %1 = arith.extui %0 : i1 to i32
    %c0_i32_0 = arith.constant 0 : i32
    %2 = arith.cmpi ne, %1, %c0_i32_0 : i32
    scf.if %2 {
      %cst_69 = arith.constant 0xFF800000 : f32
      %109 = vector.broadcast %cst_69 : f32 to vector<3x2x1xf32>
      %c0_70 = arith.constant 0 : index
      %c0_71 = arith.constant 0 : index
      %c0_72 = arith.constant 0 : index
      %110 = vector.load %arg12[%c0_70, %c0_71, %c0_72] : memref<3x2x1xf32, #tpu.memory_space<vmem>>, vector<3x2x1xf32>
      tpu.vector_store %arg12[%c0_70, %c0_71, %c0_72], %109 {strides = array<i32>} : memref<3x2x1xf32, #tpu.memory_space<vmem>>, vector<3x2x1xf32>,
      %cst_73 = arith.constant 0.000000e+00 : f32
      %111 = vector.broadcast %cst_73 : f32 to vector<3x2x1xf32>
      %c0_74 = arith.constant 0 : index
      %c0_75 = arith.constant 0 : index
      %c0_76 = arith.constant 0 : index
      %112 = vector.load %arg13[%c0_74, %c0_75, %c0_76] : memref<3x2x1xf32, #tpu.memory_space<vmem>>, vector<3x2x1xf32>
      tpu.vector_store %arg13[%c0_74, %c0_75, %c0_76], %111 {strides = array<i32>} : memref<3x2x1xf32, #tpu.memory_space<vmem>>, vector<3x2x1xf32>,
      %cst_77 = arith.constant 0.000000e+00 : f32
      %113 = vector.broadcast %cst_77 : f32 to vector<3x2x1xf32>
      %c0_78 = arith.constant 0 : index
      %c0_79 = arith.constant 0 : index
      %c0_80 = arith.constant 0 : index
      %114 = vector.load %arg14[%c0_78, %c0_79, %c0_80] : memref<3x2x1xf32, #tpu.memory_space<vmem>>, vector<3x2x1xf32>
      tpu.vector_store %arg14[%c0_78, %c0_79, %c0_80], %113 {strides = array<i32>} : memref<3x2x1xf32, #tpu.memory_space<vmem>>, vector<3x2x1xf32>,
    } else {
    }
    %c0 = arith.constant 0 : index
    %c0_1 = arith.constant 0 : index
    %3 = vector.load %arg1[%c0, %c0_1] : memref<1x128xf32, #tpu.memory_space<vmem>>, vector<1x128xf32>
    %c0_2 = arith.constant 0 : index
    %c0_3 = arith.constant 0 : index
    %4 = vector.load %arg6[%c0_2, %c0_3] : memref<2x128xbf16, #tpu.memory_space<vmem>>, vector<2x128xbf16>
    %5 = arith.extf %4 : vector<2x128xbf16> to vector<2x128xf32>
    %c0_4 = arith.constant 0 : index
    %c0_5 = arith.constant 0 : index
    %c0_6 = arith.constant 0 : index
    %6 = vector.load %arg12[%c0_4, %c0_5, %c0_6] : memref<3x2x1xf32, #tpu.memory_space<vmem>>, vector<1x2x1xf32>
    %7 = vector.shape_cast %6 : vector<1x2x1xf32> to vector<2x1xf32>
    %cst = arith.constant dense<0xFF800000> : vector<2xf32>
    %8 = vector.multi_reduction <maximumf>, %5, %cst [1] : vector<2x128xf32> to vector<2xf32>
    %9 = vector.shape_cast %8 : vector<2xf32> to vector<2x1xf32>
    %10 = arith.maximumf %7, %9 : vector<2x1xf32>
    %c0_7 = arith.constant 0 : index
    %c0_8 = arith.constant 0 : index
    %c0_9 = arith.constant 0 : index
    %11 = vector.load %arg13[%c0_7, %c0_8, %c0_9] : memref<3x2x1xf32, #tpu.memory_space<vmem>>, vector<1x2x1xf32>
    %12 = vector.shape_cast %11 : vector<1x2x1xf32> to vector<2x1xf32>
    %13 = arith.subf %7, %10 : vector<2x1xf32>
    %14 = math.exp %13 : vector<2x1xf32>
    %15 = arith.mulf %12, %14 : vector<2x1xf32>
    %16 = vector.broadcast %10 : vector<2x1xf32> to vector<2x128xf32>
    %17 = arith.subf %5, %16 : vector<2x128xf32>
    %18 = math.exp %17 : vector<2x128xf32>
    %cst_10 = arith.constant dense<0.000000e+00> : vector<2xf32>
    %19 = vector.multi_reduction <add>, %18, %cst_10 [1] : vector<2x128xf32> to vector<2xf32>
    %20 = vector.shape_cast %19 : vector<2xf32> to vector<2x1xf32>
    %21 = arith.addf %15, %20 : vector<2x1xf32>
    %c0_11 = arith.constant 0 : index
    %c0_12 = arith.constant 0 : index
    %c0_13 = arith.constant 0 : index
    %22 = vector.load %arg13[%c0_11, %c0_12, %c0_13] : memref<3x2x1xf32, #tpu.memory_space<vmem>>, vector<1x2x1xf32>
    %23 = vector.shape_cast %22 : vector<1x2x1xf32> to vector<2x1xf32>
    %24 = vector.shape_cast %21 : vector<2x1xf32> to vector<1x2x1xf32>
    tpu.vector_store %arg13[%c0_11, %c0_12, %c0_13], %24 {strides = array<i32>} : memref<3x2x1xf32, #tpu.memory_space<vmem>>, vector<1x2x1xf32>,
    %c0_14 = arith.constant 0 : index
    %c0_15 = arith.constant 0 : index
    %c0_16 = arith.constant 0 : index
    %25 = vector.load %arg14[%c0_14, %c0_15, %c0_16] : memref<3x2x1xf32, #tpu.memory_space<vmem>>, vector<1x2x1xf32>
    %26 = vector.shape_cast %25 : vector<1x2x1xf32> to vector<2x1xf32>
    %27 = vector.broadcast %3 : vector<1x128xf32> to vector<2x128xf32>
    %28 = arith.mulf %5, %27 : vector<2x128xf32>
    %cst_17 = arith.constant dense<0.000000e+00> : vector<2xf32>
    %29 = vector.multi_reduction <add>, %28, %cst_17 [1] : vector<2x128xf32> to vector<2xf32>
    %30 = vector.shape_cast %29 : vector<2xf32> to vector<2x1xf32>
    %31 = arith.addf %26, %30 : vector<2x1xf32>
    %c0_18 = arith.constant 0 : index
    %c0_19 = arith.constant 0 : index
    %c0_20 = arith.constant 0 : index
    %32 = vector.load %arg14[%c0_18, %c0_19, %c0_20] : memref<3x2x1xf32, #tpu.memory_space<vmem>>, vector<1x2x1xf32>
    %33 = vector.shape_cast %32 : vector<1x2x1xf32> to vector<2x1xf32>
    %34 = vector.shape_cast %31 : vector<2x1xf32> to vector<1x2x1xf32>
    tpu.vector_store %arg14[%c0_18, %c0_19, %c0_20], %34 {strides = array<i32>} : memref<3x2x1xf32, #tpu.memory_space<vmem>>, vector<1x2x1xf32>,
    %c0_21 = arith.constant 0 : index
    %c0_22 = arith.constant 0 : index
    %c0_23 = arith.constant 0 : index
    %35 = vector.load %arg12[%c0_21, %c0_22, %c0_23] : memref<3x2x1xf32, #tpu.memory_space<vmem>>, vector<1x2x1xf32>
    %36 = vector.shape_cast %35 : vector<1x2x1xf32> to vector<2x1xf32>
    %37 = vector.shape_cast %10 : vector<2x1xf32> to vector<1x2x1xf32>
    tpu.vector_store %arg12[%c0_21, %c0_22, %c0_23], %37 {strides = array<i32>} : memref<3x2x1xf32, #tpu.memory_space<vmem>>, vector<1x2x1xf32>,
    %c0_24 = arith.constant 0 : index
    %c0_25 = arith.constant 0 : index
    %38 = vector.load %arg7[%c0_24, %c0_25] : memref<2x128xbf16, #tpu.memory_space<vmem>>, vector<2x128xbf16>
    %39 = arith.extf %38 : vector<2x128xbf16> to vector<2x128xf32>
    %c1 = arith.constant 1 : index
    %c0_26 = arith.constant 0 : index
    %c0_27 = arith.constant 0 : index
    %40 = vector.load %arg12[%c1, %c0_26, %c0_27] : memref<3x2x1xf32, #tpu.memory_space<vmem>>, vector<1x2x1xf32>
    %41 = vector.shape_cast %40 : vector<1x2x1xf32> to vector<2x1xf32>
    %cst_28 = arith.constant dense<0xFF800000> : vector<2xf32>
    %42 = vector.multi_reduction <maximumf>, %39, %cst_28 [1] : vector<2x128xf32> to vector<2xf32>
    %43 = vector.shape_cast %42 : vector<2xf32> to vector<2x1xf32>
    %44 = arith.maximumf %41, %43 : vector<2x1xf32>
    %c1_29 = arith.constant 1 : index
    %c0_30 = arith.constant 0 : index
    %c0_31 = arith.constant 0 : index
    %45 = vector.load %arg13[%c1_29, %c0_30, %c0_31] : memref<3x2x1xf32, #tpu.memory_space<vmem>>, vector<1x2x1xf32>
    %46 = vector.shape_cast %45 : vector<1x2x1xf32> to vector<2x1xf32>
    %47 = arith.subf %41, %44 : vector<2x1xf32>
    %48 = math.exp %47 : vector<2x1xf32>
    %49 = arith.mulf %46, %48 : vector<2x1xf32>
    %50 = vector.broadcast %44 : vector<2x1xf32> to vector<2x128xf32>
    %51 = arith.subf %39, %50 : vector<2x128xf32>
    %52 = math.exp %51 : vector<2x128xf32>
    %cst_32 = arith.constant dense<0.000000e+00> : vector<2xf32>
    %53 = vector.multi_reduction <add>, %52, %cst_32 [1] : vector<2x128xf32> to vector<2xf32>
    %54 = vector.shape_cast %53 : vector<2xf32> to vector<2x1xf32>
    %55 = arith.addf %49, %54 : vector<2x1xf32>
    %c1_33 = arith.constant 1 : index
    %c0_34 = arith.constant 0 : index
    %c0_35 = arith.constant 0 : index
    %56 = vector.load %arg13[%c1_33, %c0_34, %c0_35] : memref<3x2x1xf32, #tpu.memory_space<vmem>>, vector<1x2x1xf32>
    %57 = vector.shape_cast %56 : vector<1x2x1xf32> to vector<2x1xf32>
    %58 = vector.shape_cast %55 : vector<2x1xf32> to vector<1x2x1xf32>
    tpu.vector_store %arg13[%c1_33, %c0_34, %c0_35], %58 {strides = array<i32>} : memref<3x2x1xf32, #tpu.memory_space<vmem>>, vector<1x2x1xf32>,
    %c1_36 = arith.constant 1 : index
    %c0_37 = arith.constant 0 : index
    %c0_38 = arith.constant 0 : index
    %59 = vector.load %arg14[%c1_36, %c0_37, %c0_38] : memref<3x2x1xf32, #tpu.memory_space<vmem>>, vector<1x2x1xf32>
    %60 = vector.shape_cast %59 : vector<1x2x1xf32> to vector<2x1xf32>
    %61 = vector.broadcast %3 : vector<1x128xf32> to vector<2x128xf32>
    %62 = arith.mulf %39, %61 : vector<2x128xf32>
    %cst_39 = arith.constant dense<0.000000e+00> : vector<2xf32>
    %63 = vector.multi_reduction <add>, %62, %cst_39 [1] : vector<2x128xf32> to vector<2xf32>
    %64 = vector.shape_cast %63 : vector<2xf32> to vector<2x1xf32>
    %65 = arith.addf %60, %64 : vector<2x1xf32>
    %c1_40 = arith.constant 1 : index
    %c0_41 = arith.constant 0 : index
    %c0_42 = arith.constant 0 : index
    %66 = vector.load %arg14[%c1_40, %c0_41, %c0_42] : memref<3x2x1xf32, #tpu.memory_space<vmem>>, vector<1x2x1xf32>
    %67 = vector.shape_cast %66 : vector<1x2x1xf32> to vector<2x1xf32>
    %68 = vector.shape_cast %65 : vector<2x1xf32> to vector<1x2x1xf32>
    tpu.vector_store %arg14[%c1_40, %c0_41, %c0_42], %68 {strides = array<i32>} : memref<3x2x1xf32, #tpu.memory_space<vmem>>, vector<1x2x1xf32>,
    %c1_43 = arith.constant 1 : index
    %c0_44 = arith.constant 0 : index
    %c0_45 = arith.constant 0 : index
    %69 = vector.load %arg12[%c1_43, %c0_44, %c0_45] : memref<3x2x1xf32, #tpu.memory_space<vmem>>, vector<1x2x1xf32>
    %70 = vector.shape_cast %69 : vector<1x2x1xf32> to vector<2x1xf32>
    %71 = vector.shape_cast %44 : vector<2x1xf32> to vector<1x2x1xf32>
    tpu.vector_store %arg12[%c1_43, %c0_44, %c0_45], %71 {strides = array<i32>} : memref<3x2x1xf32, #tpu.memory_space<vmem>>, vector<1x2x1xf32>,
    %c0_46 = arith.constant 0 : index
    %c0_47 = arith.constant 0 : index
    %72 = vector.load %arg8[%c0_46, %c0_47] : memref<2x128xbf16, #tpu.memory_space<vmem>>, vector<2x128xbf16>
    %73 = arith.extf %72 : vector<2x128xbf16> to vector<2x128xf32>
    %c2 = arith.constant 2 : index
    %c0_48 = arith.constant 0 : index
    %c0_49 = arith.constant 0 : index
    %74 = vector.load %arg12[%c2, %c0_48, %c0_49] : memref<3x2x1xf32, #tpu.memory_space<vmem>>, vector<1x2x1xf32>
    %75 = vector.shape_cast %74 : vector<1x2x1xf32> to vector<2x1xf32>
    %cst_50 = arith.constant dense<0xFF800000> : vector<2xf32>
    %76 = vector.multi_reduction <maximumf>, %73, %cst_50 [1] : vector<2x128xf32> to vector<2xf32>
    %77 = vector.shape_cast %76 : vector<2xf32> to vector<2x1xf32>
    %78 = arith.maximumf %75, %77 : vector<2x1xf32>
    %c2_51 = arith.constant 2 : index
    %c0_52 = arith.constant 0 : index
    %c0_53 = arith.constant 0 : index
    %79 = vector.load %arg13[%c2_51, %c0_52, %c0_53] : memref<3x2x1xf32, #tpu.memory_space<vmem>>, vector<1x2x1xf32>
    %80 = vector.shape_cast %79 : vector<1x2x1xf32> to vector<2x1xf32>
    %81 = arith.subf %75, %78 : vector<2x1xf32>
    %82 = math.exp %81 : vector<2x1xf32>
    %83 = arith.mulf %80, %82 : vector<2x1xf32>
    %84 = vector.broadcast %78 : vector<2x1xf32> to vector<2x128xf32>
    %85 = arith.subf %73, %84 : vector<2x128xf32>
    %86 = math.exp %85 : vector<2x128xf32>
    %cst_54 = arith.constant dense<0.000000e+00> : vector<2xf32>
    %87 = vector.multi_reduction <add>, %86, %cst_54 [1] : vector<2x128xf32> to vector<2xf32>
    %88 = vector.shape_cast %87 : vector<2xf32> to vector<2x1xf32>
    %89 = arith.addf %83, %88 : vector<2x1xf32>
    %c2_55 = arith.constant 2 : index
    %c0_56 = arith.constant 0 : index
    %c0_57 = arith.constant 0 : index
    %90 = vector.load %arg13[%c2_55, %c0_56, %c0_57] : memref<3x2x1xf32, #tpu.memory_space<vmem>>, vector<1x2x1xf32>
    %91 = vector.shape_cast %90 : vector<1x2x1xf32> to vector<2x1xf32>
    %92 = vector.shape_cast %89 : vector<2x1xf32> to vector<1x2x1xf32>
    tpu.vector_store %arg13[%c2_55, %c0_56, %c0_57], %92 {strides = array<i32>} : memref<3x2x1xf32, #tpu.memory_space<vmem>>, vector<1x2x1xf32>,
    %c2_58 = arith.constant 2 : index
    %c0_59 = arith.constant 0 : index
    %c0_60 = arith.constant 0 : index
    %93 = vector.load %arg14[%c2_58, %c0_59, %c0_60] : memref<3x2x1xf32, #tpu.memory_space<vmem>>, vector<1x2x1xf32>
    %94 = vector.shape_cast %93 : vector<1x2x1xf32> to vector<2x1xf32>
    %95 = vector.broadcast %3 : vector<1x128xf32> to vector<2x128xf32>
    %96 = arith.mulf %73, %95 : vector<2x128xf32>
    %cst_61 = arith.constant dense<0.000000e+00> : vector<2xf32>
    %97 = vector.multi_reduction <add>, %96, %cst_61 [1] : vector<2x128xf32> to vector<2xf32>
    %98 = vector.shape_cast %97 : vector<2xf32> to vector<2x1xf32>
    %99 = arith.addf %94, %98 : vector<2x1xf32>
    %c2_62 = arith.constant 2 : index
    %c0_63 = arith.constant 0 : index
    %c0_64 = arith.constant 0 : index
    %100 = vector.load %arg14[%c2_62, %c0_63, %c0_64] : memref<3x2x1xf32, #tpu.memory_space<vmem>>, vector<1x2x1xf32>
    %101 = vector.shape_cast %100 : vector<1x2x1xf32> to vector<2x1xf32>
    %102 = vector.shape_cast %99 : vector<2x1xf32> to vector<1x2x1xf32>
    tpu.vector_store %arg14[%c2_62, %c0_63, %c0_64], %102 {strides = array<i32>} : memref<3x2x1xf32, #tpu.memory_space<vmem>>, vector<1x2x1xf32>,
    %c2_65 = arith.constant 2 : index
    %c0_66 = arith.constant 0 : index
    %c0_67 = arith.constant 0 : index
    %103 = vector.load %arg12[%c2_65, %c0_66, %c0_67] : memref<3x2x1xf32, #tpu.memory_space<vmem>>, vector<1x2x1xf32>
    %104 = vector.shape_cast %103 : vector<1x2x1xf32> to vector<2x1xf32>
    %105 = vector.shape_cast %78 : vector<2x1xf32> to vector<1x2x1xf32>
    tpu.vector_store %arg12[%c2_65, %c0_66, %c0_67], %105 {strides = array<i32>} : memref<3x2x1xf32, #tpu.memory_space<vmem>>, vector<1x2x1xf32>,
    %c3_i32 = arith.constant 3 : i32
    %106 = arith.cmpi eq, %arg0, %c3_i32 : i32
    %107 = arith.extui %106 : i1 to i32
    %c0_i32_68 = arith.constant 0 : i32
    %108 = arith.cmpi ne, %107, %c0_i32_68 : i32
    scf.if %108 {
      %c0_69 = arith.constant 0 : index
      %c0_70 = arith.constant 0 : index
      %109 = vector.load %arg2[%c0_69, %c0_70] : memref<1x2xf32, #tpu.memory_space<vmem>>, vector<1x2xf32>
      %c0_71 = arith.constant 0 : index
      %c0_72 = arith.constant 0 : index
      %110 = vector.load %arg3[%c0_71, %c0_72] : memref<1x2xf32, #tpu.memory_space<vmem>>, vector<1x2xf32>
      %111 = arith.subf %109, %110 : vector<1x2xf32>
      %c0_73 = arith.constant 0 : index
      %c0_74 = arith.constant 0 : index
      %112 = vector.load %arg4[%c0_73, %c0_74] : memref<1x2xf32, #tpu.memory_space<vmem>>, vector<1x2xf32>
      %113 = arith.subf %111, %112 : vector<1x2xf32>
      %114 = arith.mulf %113, %113 : vector<1x2xf32>
      %115 = vector.shape_cast %114 : vector<1x2xf32> to vector<1x1x2xf32>
      %cst_75 = arith.constant dense<0.000000e+00> : vector<1xf32>
      %116 = vector.multi_reduction <add>, %115, %cst_75 [1, 2] : vector<1x1x2xf32> to vector<1xf32>
      %117 = vector.shape_cast %116 : vector<1xf32> to vector<1x1x1xf32>
      %118 = vector.extract %117[0, 0, 0] : f32 from vector<1x1x1xf32>
      %cst_76 = arith.constant 2.000000e+00 : f32
      %119 = arith.divf %118, %cst_76 : f32
      %cst_77 = arith.constant 1.000000e+00 : f32
      %120 = arith.mulf %119, %cst_77 : f32
      %c0_78 = arith.constant 0 : index
      %c0_79 = arith.constant 0 : index
      %121 = memref.load %arg5[%c0_78, %c0_79] : memref<1x1xf32, #tpu.memory_space<smem>>
      %c0_80 = arith.constant 0 : index
      %c0_81 = arith.constant 0 : index
      %c0_82 = arith.constant 0 : index
      %122 = vector.load %arg12[%c0_80, %c0_81, %c0_82] : memref<3x2x1xf32, #tpu.memory_space<vmem>>, vector<1x2x1xf32>
      %123 = vector.shape_cast %122 : vector<1x2x1xf32> to vector<2x1xf32>
      %c0_83 = arith.constant 0 : index
      %c0_84 = arith.constant 0 : index
      %c0_85 = arith.constant 0 : index
      %124 = vector.load %arg13[%c0_83, %c0_84, %c0_85] : memref<3x2x1xf32, #tpu.memory_space<vmem>>, vector<1x2x1xf32>
      %125 = vector.shape_cast %124 : vector<1x2x1xf32> to vector<2x1xf32>
      %126 = math.log %125 : vector<2x1xf32>
      %127 = arith.addf %123, %126 : vector<2x1xf32>
      %c0_86 = arith.constant 0 : index
      %c0_87 = arith.constant 0 : index
      %c0_88 = arith.constant 0 : index
      %128 = vector.load %arg14[%c0_86, %c0_87, %c0_88] : memref<3x2x1xf32, #tpu.memory_space<vmem>>, vector<1x2x1xf32>
      %129 = vector.shape_cast %128 : vector<1x2x1xf32> to vector<2x1xf32>
      %130 = arith.subf %129, %127 : vector<2x1xf32>
      %131 = vector.shape_cast %130 : vector<2x1xf32> to vector<1x2x1xf32>
      %cst_89 = arith.constant dense<0.000000e+00> : vector<1xf32>
      %132 = vector.multi_reduction <add>, %131, %cst_89 [1, 2] : vector<1x2x1xf32> to vector<1xf32>
      %133 = vector.shape_cast %132 : vector<1xf32> to vector<1x1x1xf32>
      %134 = vector.extract %133[0, 0, 0] : f32 from vector<1x1x1xf32>
      %cst_90 = arith.constant 5.000000e-01 : f32
      %135 = arith.mulf %134, %cst_90 : f32
      %cst_91 = arith.constant 0.000000e+00 : f32
      %136 = arith.addf %cst_91, %135 : f32
      %c1_92 = arith.constant 1 : index
      %c0_93 = arith.constant 0 : index
      %c0_94 = arith.constant 0 : index
      %137 = vector.load %arg12[%c1_92, %c0_93, %c0_94] : memref<3x2x1xf32, #tpu.memory_space<vmem>>, vector<1x2x1xf32>
      %138 = vector.shape_cast %137 : vector<1x2x1xf32> to vector<2x1xf32>
      %c1_95 = arith.constant 1 : index
      %c0_96 = arith.constant 0 : index
      %c0_97 = arith.constant 0 : index
      %139 = vector.load %arg13[%c1_95, %c0_96, %c0_97] : memref<3x2x1xf32, #tpu.memory_space<vmem>>, vector<1x2x1xf32>
      %140 = vector.shape_cast %139 : vector<1x2x1xf32> to vector<2x1xf32>
      %141 = math.log %140 : vector<2x1xf32>
      %142 = arith.addf %138, %141 : vector<2x1xf32>
      %c1_98 = arith.constant 1 : index
      %c0_99 = arith.constant 0 : index
      %c0_100 = arith.constant 0 : index
      %143 = vector.load %arg14[%c1_98, %c0_99, %c0_100] : memref<3x2x1xf32, #tpu.memory_space<vmem>>, vector<1x2x1xf32>
      %144 = vector.shape_cast %143 : vector<1x2x1xf32> to vector<2x1xf32>
      %145 = arith.subf %144, %142 : vector<2x1xf32>
      %146 = vector.shape_cast %145 : vector<2x1xf32> to vector<1x2x1xf32>
      %cst_101 = arith.constant dense<0.000000e+00> : vector<1xf32>
      %147 = vector.multi_reduction <add>, %146, %cst_101 [1, 2] : vector<1x2x1xf32> to vector<1xf32>
      %148 = vector.shape_cast %147 : vector<1xf32> to vector<1x1x1xf32>
      %149 = vector.extract %148[0, 0, 0] : f32 from vector<1x1x1xf32>
      %cst_102 = arith.constant 5.000000e-01 : f32
      %150 = arith.mulf %149, %cst_102 : f32
      %151 = arith.addf %136, %150 : f32
      %c2_103 = arith.constant 2 : index
      %c0_104 = arith.constant 0 : index
      %c0_105 = arith.constant 0 : index
      %152 = vector.load %arg12[%c2_103, %c0_104, %c0_105] : memref<3x2x1xf32, #tpu.memory_space<vmem>>, vector<1x2x1xf32>
      %153 = vector.shape_cast %152 : vector<1x2x1xf32> to vector<2x1xf32>
      %c2_106 = arith.constant 2 : index
      %c0_107 = arith.constant 0 : index
      %c0_108 = arith.constant 0 : index
      %154 = vector.load %arg13[%c2_106, %c0_107, %c0_108] : memref<3x2x1xf32, #tpu.memory_space<vmem>>, vector<1x2x1xf32>
      %155 = vector.shape_cast %154 : vector<1x2x1xf32> to vector<2x1xf32>
      %156 = math.log %155 : vector<2x1xf32>
      %157 = arith.addf %153, %156 : vector<2x1xf32>
      %c2_109 = arith.constant 2 : index
      %c0_110 = arith.constant 0 : index
      %c0_111 = arith.constant 0 : index
      %158 = vector.load %arg14[%c2_109, %c0_110, %c0_111] : memref<3x2x1xf32, #tpu.memory_space<vmem>>, vector<1x2x1xf32>
      %159 = vector.shape_cast %158 : vector<1x2x1xf32> to vector<2x1xf32>
      %160 = arith.subf %159, %157 : vector<2x1xf32>
      %161 = vector.shape_cast %160 : vector<2x1xf32> to vector<1x2x1xf32>
      %cst_112 = arith.constant dense<0.000000e+00> : vector<1xf32>
      %162 = vector.multi_reduction <add>, %161, %cst_112 [1, 2] : vector<1x2x1xf32> to vector<1xf32>
      %163 = vector.shape_cast %162 : vector<1xf32> to vector<1x1x1xf32>
      %164 = vector.extract %163[0, 0, 0] : f32 from vector<1x1x1xf32>
      %cst_113 = arith.constant 5.000000e-01 : f32
      %165 = arith.mulf %164, %cst_113 : f32
      %166 = arith.addf %151, %165 : f32
      %cst_114 = arith.constant 3.000000e+00 : f32
      %167 = arith.mulf %cst_114, %121 : f32
      %168 = arith.subf %167, %166 : f32
      %c0_115 = arith.constant 0 : index
      %c0_116 = arith.constant 0 : index
      %169 = memref.load %arg9[%c0_115, %c0_116] : memref<1x1xf32, #tpu.memory_space<smem>>
      memref.store %120, %arg9[%c0_115, %c0_116] : memref<1x1xf32, #tpu.memory_space<smem>>
      %c0_117 = arith.constant 0 : index
      %c0_118 = arith.constant 0 : index
      %170 = memref.load %arg10[%c0_117, %c0_118] : memref<1x1xf32, #tpu.memory_space<smem>>
      memref.store %168, %arg10[%c0_117, %c0_118] : memref<1x1xf32, #tpu.memory_space<smem>>
      %171 = arith.addf %120, %168 : f32
      %c0_119 = arith.constant 0 : index
      %c0_120 = arith.constant 0 : index
      %172 = memref.load %arg11[%c0_119, %c0_120] : memref<1x1xf32, #tpu.memory_space<smem>>
      memref.store %171, %arg11[%c0_119, %c0_120] : memref<1x1xf32, #tpu.memory_space<smem>>
    } else {
    }
    return
  }
  func.func @transform_0(%arg0: i32) -> (i32, i32) {
    %c0_i32 = arith.constant 0 : i32
    %c0_i32_0 = arith.constant 0 : i32
    return %c0_i32, %arg0 : i32, i32
  }
  func.func @transform_1(%arg0: i32) -> (i32, i32) {
    %c0_i32 = arith.constant 0 : i32
    %c0_i32_0 = arith.constant 0 : i32
    %c0_i32_1 = arith.constant 0 : i32
    return %c0_i32, %c0_i32_0 : i32, i32
  }
  func.func @transform_2(%arg0: i32) -> (i32, i32) {
    %c0_i32 = arith.constant 0 : i32
    %c0_i32_0 = arith.constant 0 : i32
    %c0_i32_1 = arith.constant 0 : i32
    return %c0_i32, %c0_i32_0 : i32, i32
  }
  func.func @transform_3(%arg0: i32) -> (i32, i32) {
    %c0_i32 = arith.constant 0 : i32
    %c0_i32_0 = arith.constant 0 : i32
    %c0_i32_1 = arith.constant 0 : i32
    return %c0_i32, %c0_i32_0 : i32, i32
  }
  func.func @transform_4(%arg0: i32) -> (i32, i32) {
    %c0_i32 = arith.constant 0 : i32
    %c0_i32_0 = arith.constant 0 : i32
    %c0_i32_1 = arith.constant 0 : i32
    return %c0_i32, %c0_i32_0 : i32, i32
  }
  func.func @transform_5(%arg0: i32) -> (i32, i32) {
    %c0_i32 = arith.constant 0 : i32
    %c0_i32_0 = arith.constant 0 : i32
    return %c0_i32, %arg0 : i32, i32
  }
  func.func @transform_6(%arg0: i32) -> (i32, i32) {
    %c0_i32 = arith.constant 0 : i32
    %c0_i32_0 = arith.constant 0 : i32
    return %c0_i32, %arg0 : i32, i32
  }
  func.func @transform_7(%arg0: i32) -> (i32, i32) {
    %c0_i32 = arith.constant 0 : i32
    %c0_i32_0 = arith.constant 0 : i32
    return %c0_i32, %arg0 : i32, i32
  }
  func.func @transform_8(%arg0: i32) -> (i32, i32) {
    %c0_i32 = arith.constant 0 : i32
    %c0_i32_0 = arith.constant 0 : i32
    %c0_i32_1 = arith.constant 0 : i32
    return %c0_i32, %c0_i32_0 : i32, i32
  }
  func.func @transform_9(%arg0: i32) -> (i32, i32) {
    %c0_i32 = arith.constant 0 : i32
    %c0_i32_0 = arith.constant 0 : i32
    %c0_i32_1 = arith.constant 0 : i32
    return %c0_i32, %c0_i32_0 : i32, i32
  }
  func.func @transform_10(%arg0: i32) -> (i32, i32) {
    %c0_i32 = arith.constant 0 : i32
    %c0_i32_0 = arith.constant 0 : i32
    %c0_i32_1 = arith.constant 0 : i32
    return %c0_i32, %c0_i32_0 : i32, i32
  }
}

</mosaic_0001>

<llo_original>
// kernel: tpu_custom_call.1
$region0: #{tpu_custom_call.1}
  #allocation0 [shape = 'u32[]', space=smem, size = 0x4, offset = 0x4, fixed_abs, tag = 'smem constant byte address 0x4 - core index']
  #allocation1 [shape = 'u32[144,128]{1,0:T(1,128)}', space=vmem, size = 0x12000, scoped, tag = 'internal scratch']
  #allocation2 [shape = 'f32[3,2,1]{2,1,0:T(2,128)}', space=vmem, size = 0xc00, scoped, tag = 'scratch operand']
  #allocation3 [shape = 'f32[3,2,1]{2,1,0:T(2,128)}', space=vmem, size = 0xc00, scoped, tag = 'scratch operand']
  #allocation4 [shape = 'f32[3,2,1]{2,1,0:T(2,128)}', space=vmem, size = 0xc00, scoped, tag = 'scratch operand']
  #allocation5 [shape = 'f32[1,1]{1,0:T(1,128)S(6)}', space=smem, size = 0x200, scoped, tag = 'scoped memory for tpu_custom_call.1']
  %s0 = inlined_call_operand.hbm [shape: f32[1,512], index: 0, kind: input, shape index: {}]
  %s1 = inlined_call_operand.vmem [shape: f32[1,2], index: 1, kind: input, shape index: {}]
  %s2 = inlined_call_operand.vmem [shape: f32[1,2], index: 2, kind: input, shape index: {}]
  %s3 = inlined_call_operand.vmem [shape: f32[1,2], index: 3, kind: input, shape index: {}]
  %s4 = inlined_call_operand.<no memory space> [shape: f32[1,1], index: 4, kind: input, shape index: {}]
  %s5 = inlined_call_operand.vmem [shape: bf16[2,512], index: 5, kind: input, shape index: {}]
  %s6 = inlined_call_operand.vmem [shape: bf16[2,512], index: 6, kind: input, shape index: {}]
  %s7 = inlined_call_operand.vmem [shape: bf16[2,512], index: 7, kind: input, shape index: {}]
  %s8 = inlined_call_operand.hbm [shape: f32[1,1], index: 8, kind: output, shape index: {0}]
  %s9 = inlined_call_operand.hbm [shape: f32[1,1], index: 9, kind: output, shape index: {1}]
  %s10 = inlined_call_operand.hbm [shape: f32[1,1], index: 10, kind: output, shape index: {2}]
  %11 = xla_tuple %s8, %s9, %s10
  %s12 = sld [smem:[#allocation0]]
  $region93: #{tpu_custom_call.1} parent=0
    _
  %s14 = ssub.s32 1, %s12
  %s15 = scalar_select 0, %s14, %s12
  %16 = sst [smem:[#allocation5]] %s4
  $region1: #{tpu_custom_call.1} parent=0
    #allocation6 [shape = 'u8[1024]{0}', space=vmem, size = 0x400, scoped, tag = 'input window, operand 0']
    #allocation7 [shape = 's32[2]{0}', space=sflag, size = 0x8, scoped, tag = 'scoped memory for tpu_custom_call.1']
    #allocation8 [shape = 's32[2]{0}', space=sflag, size = 0x8, scoped, tag = 'scoped memory for tpu_custom_call.1']
    #allocation9 [shape = 'u8[512]{0}', space=smem, size = 0x200, scoped, tag = 'output window, operand 0, single buffered']
    #allocation10 [shape = 'u8[512]{0}', space=smem, size = 0x200, scoped, tag = 'output window, operand 1, single buffered']
    #allocation11 [shape = 's32[1]{0}', space=sflag, size = 0x4, scoped, tag = 'scoped memory for tpu_custom_call.1']
    #allocation12 [shape = 'u8[512]{0}', space=smem, size = 0x200, scoped, tag = 'output window, operand 2, single buffered']
    %17 = vsyncpa [#allocation7], 0
    %s18 = scalar_lea.sflag [#allocation7], 1
    %19 = vsyncpa %s18, 0
    %20 = vsyncpa [#allocation8], 0
    %21 = vsyncpa [#allocation11], 0
    loop: start=0, step=1, limit=6
    $region2: #{tpu_custom_call.1} parent=1 // loop_pre_header
      _
    $region3: #{tpu_custom_call.1} parent=1 // loop_header
      %s23 = sphi 0, %s27
      %p24 = scmp.ge.s32.totalorder %s23, 6
      %s33 = sphi 0, %s35
      %s36 = sphi 0, %s33
      %s37 = sphi 0, %s36
      %s53 = sphi 0, %s37
      %s57 = sphi 0, %s57
      %s59 = sphi 0, %s57
      %s60 = sphi 0, %s59
      %s74 = sphi 0, %s60
      %s78 = sphi 0, %s78
      %s80 = sphi 0, %s78
      %s81 = sphi 0, %s80
      %s95 = sphi 0, %s81
      %s99 = sphi 0, %s99
      %s101 = sphi 0, %s99
      %s102 = sphi 0, %s101
      %s116 = sphi 0, %s102
      %s120 = sphi 0, %s120
      %s122 = sphi 0, %s120
      %s123 = sphi 0, %s122
      %s137 = sphi 0, %s123
      %s143 = sphi 0, %s145
      %s146 = sphi 0, %s143
      %s147 = sphi 0, %s146
      %s163 = sphi 0, %s147
      %s169 = sphi 0, %s171
      %s172 = sphi 0, %s169
      %s173 = sphi 0, %s172
      %s189 = sphi 0, %s173
      %s195 = sphi 0, %s197
      %s198 = sphi 0, %s195
      %s199 = sphi 0, %s198
      %s215 = sphi 0, %s199
      %s219 = sphi 0, %s219
      %s221 = sphi 0, %s219
      %s222 = sphi 0, %s221
      %s236 = sphi 0, %s222
      %s240 = sphi 0, %s240
      %s242 = sphi 0, %s240
      %s243 = sphi 0, %s242
      %s257 = sphi 0, %s243
      %s261 = sphi 0, %s261
      %s263 = sphi 0, %s261
      %s264 = sphi 0, %s263
      %s278 = sphi 0, %s264
    $region4: #{tpu_custom_call.1} parent=1 // loop_header_branch
      %26 = sbr.rel (%p24) target = $region8
    $region5: #{tpu_custom_call.1} parent=1 // loop_body
      %s28 = ssub.s32 %s23, 1
      %s29 = ssub.s32 %s23, 2
      %s30 = sadd.s32 %s23, 1
      %s31 = ssub.s32 %s23, %s30
      %p32 = scmp.eq.s32.totalorder %s31, 0
      %s34 = sadd.s32 %s33, 1
      %s35 = scalar_select %p32, %s33, %s34
      %p38 = pneg %p32
      %p39 = scmp.eq.s32.totalorder %s23, 3
      %p40 = por %p38, %p39
      %p41 = scmp.ne.s32.totalorder %s33, %s36
      %p42 = scmp.eq.s32.totalorder %s23, 0
      %p43 = por %p41, %p42
      %p44 = scmp.ne.s32.totalorder %s33, %s36
      %p45 = scmp.eq.s32.totalorder %s28, 3
      %p46 = por %p44, %p45
      %p47 = scmp.ne.s32.totalorder %s36, %s37
      %p48 = scmp.eq.s32.totalorder %s28, 0
      %p49 = por %p47, %p48
      %p50 = scmp.ne.s32.totalorder %s36, %s37
      %p51 = scmp.eq.s32.totalorder %s29, 3
      %p52 = por %p50, %p51
      %p54 = scmp.ne.s32.totalorder %s37, %s53
      %p55 = scmp.eq.s32.totalorder %s29, 0
      %p56 = por %p54, %p55
      %s58 = sadd.s32 %s57, 1
      %p61 = scmp.eq.s32.totalorder %s23, 3
      %p62 = scmp.ne.s32.totalorder %s57, %s59
      %p63 = scmp.eq.s32.totalorder %s23, 0
      %p64 = por %p62, %p63
      %p65 = scmp.ne.s32.totalorder %s57, %s59
      %p66 = scmp.eq.s32.totalorder %s28, 3
      %p67 = por %p65, %p66
      %p68 = scmp.ne.s32.totalorder %s59, %s60
      %p69 = scmp.eq.s32.totalorder %s28, 0
      %p70 = por %p68, %p69
      %p71 = scmp.ne.s32.totalorder %s59, %s60
      %p72 = scmp.eq.s32.totalorder %s29, 3
      %p73 = por %p71, %p72
      %p75 = scmp.ne.s32.totalorder %s60, %s74
      %p76 = scmp.eq.s32.totalorder %s29, 0
      %p77 = por %p75, %p76
      %s79 = sadd.s32 %s78, 1
      %p82 = scmp.eq.s32.totalorder %s23, 3
      %p83 = scmp.ne.s32.totalorder %s78, %s80
      %p84 = scmp.eq.s32.totalorder %s23, 0
      %p85 = por %p83, %p84
      %p86 = scmp.ne.s32.totalorder %s78, %s80
      %p87 = scmp.eq.s32.totalorder %s28, 3
      %p88 = por %p86, %p87
      %p89 = scmp.ne.s32.totalorder %s80, %s81
      %p90 = scmp.eq.s32.totalorder %s28, 0
      %p91 = por %p89, %p90
      %p92 = scmp.ne.s32.totalorder %s80, %s81
      %p93 = scmp.eq.s32.totalorder %s29, 3
      %p94 = por %p92, %p93
      %p96 = scmp.ne.s32.totalorder %s81, %s95
      %p97 = scmp.eq.s32.totalorder %s29, 0
      %p98 = por %p96, %p97
      %s100 = sadd.s32 %s99, 1
      %p103 = scmp.eq.s32.totalorder %s23, 3
      %p104 = scmp.ne.s32.totalorder %s99, %s101
      %p105 = scmp.eq.s32.totalorder %s23, 0
      %p106 = por %p104, %p105
      %p107 = scmp.ne.s32.totalorder %s99, %s101
      %p108 = scmp.eq.s32.totalorder %s28, 3
      %p109 = por %p107, %p108
      %p110 = scmp.ne.s32.totalorder %s101, %s102
      %p111 = scmp.eq.s32.totalorder %s28, 0
      %p112 = por %p110, %p111
      %p113 = scmp.ne.s32.totalorder %s101, %s102
      %p114 = scmp.eq.s32.totalorder %s29, 3
      %p115 = por %p113, %p114
      %p117 = scmp.ne.s32.totalorder %s102, %s116
      %p118 = scmp.eq.s32.totalorder %s29, 0
      %p119 = por %p117, %p118
      %s121 = sadd.s32 %s120, 1
      %p124 = scmp.eq.s32.totalorder %s23, 3
      %p125 = scmp.ne.s32.totalorder %s120, %s122
      %p126 = scmp.eq.s32.totalorder %s23, 0
      %p127 = por %p125, %p126
      %p128 = scmp.ne.s32.totalorder %s120, %s122
      %p129 = scmp.eq.s32.totalorder %s28, 3
      %p130 = por %p128, %p129
      %p131 = scmp.ne.s32.totalorder %s122, %s123
      %p132 = scmp.eq.s32.totalorder %s28, 0
      %p133 = por %p131, %p132
      %p134 = scmp.ne.s32.totalorder %s122, %s123
      %p135 = scmp.eq.s32.totalorder %s29, 3
      %p136 = por %p134, %p135
      %p138 = scmp.ne.s32.totalorder %s123, %s137
      %p139 = scmp.eq.s32.totalorder %s29, 0
      %p140 = por %p138, %p139
      %s141 = ssub.s32 %s23, %s30
      %p142 = scmp.eq.s32.totalorder %s141, 0
      %s144 = sadd.s32 %s143, 1
      %s145 = scalar_select %p142, %s143, %s144
      %p148 = pneg %p142
      %p149 = scmp.eq.s32.totalorder %s23, 3
      %p150 = por %p148, %p149
      %p151 = scmp.ne.s32.totalorder %s143, %s146
      %p152 = scmp.eq.s32.totalorder %s23, 0
      %p153 = por %p151, %p152
      %p154 = scmp.ne.s32.totalorder %s143, %s146
      %p155 = scmp.eq.s32.totalorder %s28, 3
      %p156 = por %p154, %p155
      %p157 = scmp.ne.s32.totalorder %s146, %s147
      %p158 = scmp.eq.s32.totalorder %s28, 0
      %p159 = por %p157, %p158
      %p160 = scmp.ne.s32.totalorder %s146, %s147
      %p161 = scmp.eq.s32.totalorder %s29, 3
      %p162 = por %p160, %p161
      %p164 = scmp.ne.s32.totalorder %s147, %s163
      %p165 = scmp.eq.s32.totalorder %s29, 0
      %p166 = por %p164, %p165
      %s167 = ssub.s32 %s23, %s30
      %p168 = scmp.eq.s32.totalorder %s167, 0
      %s170 = sadd.s32 %s169, 1
      %s171 = scalar_select %p168, %s169, %s170
      %p174 = pneg %p168
      %p175 = scmp.eq.s32.totalorder %s23, 3
      %p176 = por %p174, %p175
      %p177 = scmp.ne.s32.totalorder %s169, %s172
      %p178 = scmp.eq.s32.totalorder %s23, 0
      %p179 = por %p177, %p178
      %p180 = scmp.ne.s32.totalorder %s169, %s172
      %p181 = scmp.eq.s32.totalorder %s28, 3
      %p182 = por %p180, %p181
      %p183 = scmp.ne.s32.totalorder %s172, %s173
      %p184 = scmp.eq.s32.totalorder %s28, 0
      %p185 = por %p183, %p184
      %p186 = scmp.ne.s32.totalorder %s172, %s173
      %p187 = scmp.eq.s32.totalorder %s29, 3
      %p188 = por %p186, %p187
      %p190 = scmp.ne.s32.totalorder %s173, %s189
      %p191 = scmp.eq.s32.totalorder %s29, 0
      %p192 = por %p190, %p191
      %s193 = ssub.s32 %s23, %s30
      %p194 = scmp.eq.s32.totalorder %s193, 0
      %s196 = sadd.s32 %s195, 1
      %s197 = scalar_select %p194, %s195, %s196
      %p200 = pneg %p194
      %p201 = scmp.eq.s32.totalorder %s23, 3
      %p202 = por %p200, %p201
      %p203 = scmp.ne.s32.totalorder %s195, %s198
      %p204 = scmp.eq.s32.totalorder %s23, 0
      %p205 = por %p203, %p204
      %p206 = scmp.ne.s32.totalorder %s195, %s198
      %p207 = scmp.eq.s32.totalorder %s28, 3
      %p208 = por %p206, %p207
      %p209 = scmp.ne.s32.totalorder %s198, %s199
      %p210 = scmp.eq.s32.totalorder %s28, 0
      %p211 = por %p209, %p210
      %p212 = scmp.ne.s32.totalorder %s198, %s199
      %p213 = scmp.eq.s32.totalorder %s29, 3
      %p214 = por %p212, %p213
      %p216 = scmp.ne.s32.totalorder %s199, %s215
      %p217 = scmp.eq.s32.totalorder %s29, 0
      %p218 = por %p216, %p217
      %s220 = sadd.s32 %s219, 1
      %p223 = scmp.eq.s32.totalorder %s23, 3
      %p224 = scmp.ne.s32.totalorder %s219, %s221
      %p225 = scmp.eq.s32.totalorder %s23, 0
      %p226 = por %p224, %p225
      %p227 = scmp.ne.s32.totalorder %s219, %s221
      %p228 = scmp.eq.s32.totalorder %s28, 3
      %p229 = por %p227, %p228
      %p230 = scmp.ne.s32.totalorder %s221, %s222
      %p231 = scmp.eq.s32.totalorder %s28, 0
      %p232 = por %p230, %p231
      %p233 = scmp.ne.s32.totalorder %s221, %s222
      %p234 = scmp.eq.s32.totalorder %s29, 3
      %p235 = por %p233, %p234
      %p237 = scmp.ne.s32.totalorder %s222, %s236
      %p238 = scmp.eq.s32.totalorder %s29, 0
      %p239 = por %p237, %p238
      %s241 = sadd.s32 %s240, 1
      %p244 = scmp.eq.s32.totalorder %s23, 3
      %p245 = scmp.ne.s32.totalorder %s240, %s242
      %p246 = scmp.eq.s32.totalorder %s23, 0
      %p247 = por %p245, %p246
      %p248 = scmp.ne.s32.totalorder %s240, %s242
      %p249 = scmp.eq.s32.totalorder %s28, 3
      %p250 = por %p248, %p249
      %p251 = scmp.ne.s32.totalorder %s242, %s243
      %p252 = scmp.eq.s32.totalorder %s28, 0
      %p253 = por %p251, %p252
      %p254 = scmp.ne.s32.totalorder %s242, %s243
      %p255 = scmp.eq.s32.totalorder %s29, 3
      %p256 = por %p254, %p255
      %p258 = scmp.ne.s32.totalorder %s243, %s257
      %p259 = scmp.eq.s32.totalorder %s29, 0
      %p260 = por %p258, %p259
      %s262 = sadd.s32 %s261, 1
      %p265 = scmp.eq.s32.totalorder %s23, 3
      %p266 = scmp.ne.s32.totalorder %s261, %s263
      %p267 = scmp.eq.s32.totalorder %s23, 0
      %p268 = por %p266, %p267
      %p269 = scmp.ne.s32.totalorder %s261, %s263
      %p270 = scmp.eq.s32.totalorder %s28, 3
      %p271 = por %p269, %p270
      %p272 = scmp.ne.s32.totalorder %s263, %s264
      %p273 = scmp.eq.s32.totalorder %s28, 0
      %p274 = por %p272, %p273
      %p275 = scmp.ne.s32.totalorder %s263, %s264
      %p276 = scmp.eq.s32.totalorder %s29, 3
      %p277 = por %p275, %p276
      %p279 = scmp.ne.s32.totalorder %s264, %s278
      %p280 = scmp.eq.s32.totalorder %s29, 0
      %p281 = por %p279, %p280
      %p282 = scmp.le.s32.totalorder 1, %s23
      %p283 = scmp.lt.s32.totalorder %s23, 5
      %p284 = pnand %p282, %p283
      %p285 = pneg %p284
      // Predicated region
      $region9: #{tpu_custom_call.1} parent=5 // pred_check
        _
      $region10: #{tpu_custom_call.1} parent=5 // pred_check_branch
        %287 = sbr.rel (%p284) target = $region12
      $region11: #{tpu_custom_call.1} parent=5 // pred_region
        %s288 = ssub.s32 %s23, 1
        // Predicated region
        $region13: #{tpu_custom_call.1} parent=11 // pred_check
          %p289 = pneg %p70
        $region14: #{tpu_custom_call.1} parent=11 // pred_check_branch
          %291 = sbr.rel (%p289) target = $region16
        $region15: #{tpu_custom_call.1} parent=11 // pred_region
          _
        $region16: #{tpu_custom_call.1} parent=11 // pred_fallthru
          _
        // Predicated region
        $region17: #{tpu_custom_call.1} parent=11 // pred_check
          %p292 = pneg %p91
        $region18: #{tpu_custom_call.1} parent=11 // pred_check_branch
          %294 = sbr.rel (%p292) target = $region20
        $region19: #{tpu_custom_call.1} parent=11 // pred_region
          _
        $region20: #{tpu_custom_call.1} parent=11 // pred_fallthru
          _
        // Predicated region
        $region21: #{tpu_custom_call.1} parent=11 // pred_check
          %p295 = pneg %p112
        $region22: #{tpu_custom_call.1} parent=11 // pred_check_branch
          %297 = sbr.rel (%p295) target = $region24
        $region23: #{tpu_custom_call.1} parent=11 // pred_region
          _
        $region24: #{tpu_custom_call.1} parent=11 // pred_fallthru
          _
        // Predicated region
        $region25: #{tpu_custom_call.1} parent=11 // pred_check
          %p298 = pneg %p133
        $region26: #{tpu_custom_call.1} parent=11 // pred_check_branch
          %300 = sbr.rel (%p298) target = $region28
        $region27: #{tpu_custom_call.1} parent=11 // pred_region
          _
        $region28: #{tpu_custom_call.1} parent=11 // pred_fallthru
          _
      $region12: #{tpu_custom_call.1} parent=5 // pred_fallthru
        _
      %p301 = scmp.lt.s32.totalorder %s23, 4
      // Predicated region
      $region29: #{tpu_custom_call.1} parent=5 // pred_check
        %p302 = pneg %p301
      $region30: #{tpu_custom_call.1} parent=5 // pred_check_branch
        %304 = sbr.rel (%p302) target = $region32
      $region31: #{tpu_custom_call.1} parent=5 // pred_region
        // Predicated region
        $region33: #{tpu_custom_call.1} parent=31 // pred_check
          %p305 = pneg %p43
        $region34: #{tpu_custom_call.1} parent=31 // pred_check_branch
          %307 = sbr.rel (%p305) target = $region36
        $region35: #{tpu_custom_call.1} parent=31 // pred_region
          %s308 = sand.u32 %s33, 1
          %s309 = scalar_lea.sflag [#allocation7], %s308
          %s310 = sand.u32 %s33, 1
          %s311 = scalar_lea.vmem [#allocation6], %s310
          %s313 = ssub.s32 16, 16
          %314 = vsyncadd %s309, %s313
          %s315 = smul.addr %s23, 16
          %s316 = scalar_lea.hbm %s0, %s315
          %s318 = sshll.u32 %s311, 4
          %s319 = int_to_ptr.vmem [resolvable:$true] %s318
          %321 = dma.hbm_to_vmem [thread:$0]  %s316, 16, %s319, %s309
        $region36: #{tpu_custom_call.1} parent=31 // pred_fallthru
          _
        // Predicated region
        $region37: #{tpu_custom_call.1} parent=31 // pred_check
          %p322 = pneg %p153
        $region38: #{tpu_custom_call.1} parent=31 // pred_check_branch
          %324 = sbr.rel (%p322) target = $region40
        $region39: #{tpu_custom_call.1} parent=31 // pred_region
          %p325 = scmp.lt.s32.totalorder %s23, 3
          %s326 = scalar_select %p325, %s23, 3
          %s327 = scalar_lea.vmem %s5, %s326
        $region40: #{tpu_custom_call.1} parent=31 // pred_fallthru
          _
        // Predicated region
        $region41: #{tpu_custom_call.1} parent=31 // pred_check
          %p328 = pneg %p179
        $region42: #{tpu_custom_call.1} parent=31 // pred_check_branch
          %330 = sbr.rel (%p328) target = $region44
        $region43: #{tpu_custom_call.1} parent=31 // pred_region
          %p331 = scmp.lt.s32.totalorder %s23, 3
          %s332 = scalar_select %p331, %s23, 3
          %s333 = scalar_lea.vmem %s6, %s332
        $region44: #{tpu_custom_call.1} parent=31 // pred_fallthru
          _
        // Predicated region
        $region45: #{tpu_custom_call.1} parent=31 // pred_check
          %p334 = pneg %p205
        $region46: #{tpu_custom_call.1} parent=31 // pred_check_branch
          %336 = sbr.rel (%p334) target = $region48
        $region47: #{tpu_custom_call.1} parent=31 // pred_region
          %p337 = scmp.lt.s32.totalorder %s23, 3
          %s338 = scalar_select %p337, %s23, 3
          %s339 = scalar_lea.vmem %s7, %s338
        $region48: #{tpu_custom_call.1} parent=31 // pred_fallthru
          _
      $region32: #{tpu_custom_call.1} parent=5 // pred_fallthru
        _
      %p340 = scmp.le.s32.totalorder 1, %s23
      %p341 = scmp.lt.s32.totalorder %s23, 5
      %p342 = pnand %p340, %p341
      %p343 = pneg %p342
      // Predicated region
      $region49: #{tpu_custom_call.1} parent=5 // pred_check
        _
      $region50: #{tpu_custom_call.1} parent=5 // pred_check_branch
        %345 = sbr.rel (%p342) target = $region52
      $region51: #{tpu_custom_call.1} parent=5 // pred_region
        %s346 = ssub.s32 %s23, 1
        %s347 = sand.u32 %s36, 1
        %s348 = scalar_lea.sflag [#allocation7], %s347
        %s349 = sand.u32 %s36, 1
        %s350 = scalar_lea.vmem [#allocation6], %s349
        // Predicated region
        $region53: #{tpu_custom_call.1} parent=51 // pred_check
          %p351 = pneg %p49
        $region54: #{tpu_custom_call.1} parent=51 // pred_check_branch
          %353 = sbr.rel (%p351) target = $region56
        $region55: #{tpu_custom_call.1} parent=51 // pred_region
          %354 = dma.done %s348, 16
        $region56: #{tpu_custom_call.1} parent=51 // pred_fallthru
          _
        %s355 = sand.u32 %s36, 1
        %s356 = scalar_lea.sflag [#allocation7], %s355
        %s357 = sand.u32 %s36, 1
        %s358 = scalar_lea.vmem [#allocation6], %s357
        %p359 = pneg %p49
        %p360 = pneg %p46
        %p361 = pneg %p70
        %p362 = pneg %p67
        %p363 = pneg %p91
        %p364 = pneg %p88
        %p365 = pneg %p112
        %p366 = pneg %p109
        %p367 = pneg %p133
        %p368 = pneg %p130
        %p369 = scmp.lt.s32.totalorder %s28, 3
        %s370 = scalar_select %p369, %s28, 3
        %s371 = scalar_lea.vmem %s5, %s370
        %p372 = pneg %p159
        %p373 = pneg %p156
        %p374 = scmp.lt.s32.totalorder %s28, 3
        %s375 = scalar_select %p374, %s28, 3
        %s376 = scalar_lea.vmem %s6, %s375
        %p377 = pneg %p185
        %p378 = pneg %p182
        %p379 = scmp.lt.s32.totalorder %s28, 3
        %s380 = scalar_select %p379, %s28, 3
        %s381 = scalar_lea.vmem %s7, %s380
        %p382 = pneg %p211
        %p383 = pneg %p208
        %p384 = pneg %p232
        %p385 = pneg %p229
        %p386 = pneg %p253
        %p387 = pneg %p250
        %p388 = pneg %p274
        %p389 = pneg %p271
        %p390 = scmp.lt.s32.totalorder %s28, 3
        %s391 = scalar_select %p390, %s28, 3
        %s392 = scalar_lea.vmem %s5, %s391
        %p393 = scmp.lt.s32.totalorder %s28, 3
        %s394 = scalar_select %p393, %s28, 3
        %s395 = scalar_lea.vmem %s6, %s394
        %p396 = scmp.lt.s32.totalorder %s28, 3
        %s397 = scalar_select %p396, %s28, 3
        %s398 = scalar_lea.vmem %s7, %s397
        %p399 = scmp.eq.s32.totalorder %s28, 0
        // Predicated region
        $region57: #{tpu_custom_call.1} parent=51 // pred_check
          %p400 = pneg %p399
        $region58: #{tpu_custom_call.1} parent=51 // pred_check_branch
          %402 = sbr.rel (%p400) target = $region60
        $region59: #{tpu_custom_call.1} parent=51 // pred_region
          %vm403 = vcmask 1024
          %404 = vst.msk [vmem:[#allocation2] sm:$0x3] %vm403, -inf
          %405 = vst.msk [vmem:[#allocation2 + $0x2] sm:$0x3] %vm403, -inf
          %406 = vst.msk [vmem:[#allocation2 + $0x4] sm:$0x3] %vm403, -inf
          %407 = vst.msk [vmem:[#allocation3] sm:$0x3] %vm403, 0.0
          %408 = vst.msk [vmem:[#allocation3 + $0x2] sm:$0x3] %vm403, 0.0
          %409 = vst.msk [vmem:[#allocation3 + $0x4] sm:$0x3] %vm403, 0.0
          %410 = vst.msk [vmem:[#allocation4] sm:$0x3] %vm403, 0.0
          %411 = vst.msk [vmem:[#allocation4 + $0x2] sm:$0x3] %vm403, 0.0
          %412 = vst.msk [vmem:[#allocation4 + $0x4] sm:$0x3] %vm403, 0.0
        $region60: #{tpu_custom_call.1} parent=51 // pred_fallthru
          _
        %v413 = vld [vmem:[%s350] sm:$0x1]
        %v414 = vld [vmem:[%s392] sm:$0x1]
        %v415 = vunpack.c.l.bf16 %v414
        %v416 = vld [vmem:[#allocation2] sm:$0x3]
        %vm417 = vcmask 1041408
        %v418 = vsel %vm417, %v415, -inf
        %419 = vmax.xlane.f32.xlu0 %v418
        %v420 = vpop.xlane.xlu0 %419
        %v421 = vmax.f32 %v416, %v420
        %v422 = vld [vmem:[#allocation3] sm:$0x3]
        %v423 = vsub.f32 %v416, %v421
        %v424 = vmul.f32 %v423, 1.442695
        %v425 = vpow.pop %v424
        %v426 = vmul.f32 %v422, %v425
        %428 = vset.pattern.permute.xlu0 0
        %429 = vperm.xlu0 %428, %v421
        %v430 = vpop.permute.xlu0 %429
        %v432 = vsub.f32 %v415, %v430
        %v433 = vmul.f32 %v432, 1.442695
        %v434 = vpow.pop %v433
        %v435 = vsel %vm417, %v434, 0.0
        %436 = vadd.xlane.f32.xlu0 %v435
        %v437 = vpop.xlane.xlu0 %436
        %v438 = vadd.f32 %v426, %v437
        %vm439 = vcmask 1024
        %440 = vst.msk [vmem:[#allocation3] sm:$0x3] %vm439, %v438
        %v441 = vld [vmem:[#allocation4] sm:$0x3]
        %v443 = vlaneseq
        %v444 = vshrl.u32 %v443, 7
        %v445 = vsub.s32 0, %v444
        %v446 = vrot.slane %v413, %v445
        %v448 = vmul.f32 %v415, %v446
        %v449 = vsel %vm417, %v448, 0.0
        %450 = vadd.xlane.f32.xlu0 %v449
        %v451 = vpop.xlane.xlu0 %450
        %v452 = vadd.f32 %v441, %v451
        %453 = vst.msk [vmem:[#allocation4] sm:$0x3] %vm439, %v452
        %454 = vst.msk [vmem:[#allocation2] sm:$0x3] %vm439, %v421
        %v455 = vld [vmem:[%s395] sm:$0x1]
        %v456 = vunpack.c.l.bf16 %v455
        %s457 = scalar_lea.vmem [#allocation2], 2
        %v458 = vld [vmem:[%s457] sm:$0x3]
        %v459 = vsel %vm417, %v456, -inf
        %460 = vmax.xlane.f32.xlu0 %v459
        %v461 = vpop.xlane.xlu0 %460
        %v462 = vmax.f32 %v458, %v461
        %s463 = scalar_lea.vmem [#allocation3], 2
        %v464 = vld [vmem:[%s463] sm:$0x3]
        %v465 = vsub.f32 %v458, %v462
        %v466 = vmul.f32 %v465, 1.442695
        %v467 = vpow.pop %v466
        %v468 = vmul.f32 %v464, %v467
        %470 = vset.pattern.permute.xlu0 0
        %471 = vperm.xlu0 %470, %v462
        %v472 = vpop.permute.xlu0 %471
        %v474 = vsub.f32 %v456, %v472
        %v475 = vmul.f32 %v474, 1.442695
        %v476 = vpow.pop %v475
        %v477 = vsel %vm417, %v476, 0.0
        %478 = vadd.xlane.f32.xlu0 %v477
        %v479 = vpop.xlane.xlu0 %478
        %v480 = vadd.f32 %v468, %v479
        %481 = vst.msk [vmem:[%s463] sm:$0x3] %vm439, %v480
        %s482 = scalar_lea.vmem [#allocation4], 2
        %v483 = vld [vmem:[%s482] sm:$0x3]
        %v484 = vmul.f32 %v456, %v446
        %v485 = vsel %vm417, %v484, 0.0
        %486 = vadd.xlane.f32.xlu0 %v485
        %v487 = vpop.xlane.xlu0 %486
        %v488 = vadd.f32 %v483, %v487
        %489 = vst.msk [vmem:[%s482] sm:$0x3] %vm439, %v488
        %490 = vst.msk [vmem:[%s457] sm:$0x3] %vm439, %v462
        %v491 = vld [vmem:[%s398] sm:$0x1]
        %v492 = vunpack.c.l.bf16 %v491
        %s493 = scalar_lea.vmem [#allocation2], 4
        %v494 = vld [vmem:[%s493] sm:$0x3]
        %v495 = vsel %vm417, %v492, -inf
        %496 = vmax.xlane.f32.xlu0 %v495
        %v497 = vpop.xlane.xlu0 %496
        %v498 = vmax.f32 %v494, %v497
        %s499 = scalar_lea.vmem [#allocation3], 4
        %v500 = vld [vmem:[%s499] sm:$0x3]
        %v501 = vsub.f32 %v494, %v498
        %v502 = vmul.f32 %v501, 1.442695
        %v503 = vpow.pop %v502
        %v504 = vmul.f32 %v500, %v503
        %506 = vset.pattern.permute.xlu0 0
        %507 = vperm.xlu0 %506, %v498
        %v508 = vpop.permute.xlu0 %507
        %v510 = vsub.f32 %v492, %v508
        %v511 = vmul.f32 %v510, 1.442695
        %v512 = vpow.pop %v511
        %v513 = vsel %vm417, %v512, 0.0
        %514 = vadd.xlane.f32.xlu0 %v513
        %v515 = vpop.xlane.xlu0 %514
        %v516 = vadd.f32 %v504, %v515
        %517 = vst.msk [vmem:[%s499] sm:$0x3] %vm439, %v516
        %s518 = scalar_lea.vmem [#allocation4], 4
        %v519 = vld [vmem:[%s518] sm:$0x3]
        %v520 = vmul.f32 %v492, %v446
        %v521 = vsel %vm417, %v520, 0.0
        %522 = vadd.xlane.f32.xlu0 %v521
        %v523 = vpop.xlane.xlu0 %522
        %v524 = vadd.f32 %v519, %v523
        %525 = vst.msk [vmem:[%s518] sm:$0x3] %vm439, %v524
        %526 = vst.msk [vmem:[%s493] sm:$0x3] %vm439, %v498
        %p527 = scmp.eq.s32.totalorder %s28, 3
        // Predicated region
        $region61: #{tpu_custom_call.1} parent=51 // pred_check
          %p528 = pneg %p527
        $region62: #{tpu_custom_call.1} parent=51 // pred_check_branch
          %530 = sbr.rel (%p528) target = $region64
        $region63: #{tpu_custom_call.1} parent=51 // pred_region
          %v531 = vld [vmem:[%s1] sm:$0x1]
          %v532 = vld [vmem:[%s2] sm:$0x1]
          %v533 = vsub.f32 %v531, %v532
          %v534 = vld [vmem:[%s3] sm:$0x1]
          %v535 = vsub.f32 %v533, %v534
          %v536 = vmul.f32 %v535, %v535
          %vm537 = vcmask 8192
          %v538 = vsel %vm537, %v536, 0.0
          %539 = vadd.xlane.f32.xlu0 %v538
          %v540 = vpop.xlane.xlu0 %539
          %v541 = vrot.slane %v540, 4
          %v542 = vadd.f32 %v540, %v541
          %v543 = vrot.slane %v542, 2
          %v544 = vadd.f32 %v542, %v543
          %v545 = vrot.slane %v544, 1
          %v546 = vadd.f32 %v544, %v545
          %s547 = vtos %v546
          %v548 = vrcp.pop 2.0
          %s549 = vtos %v548
          %s550 = smul.f32 %s547, %s549
          %s551 = sld [smem:[#allocation5]]
          %v552 = vld [vmem:[#allocation2] sm:$0x3]
          %v553 = vld [vmem:[#allocation3] sm:$0x3]
          %v554 = vlog2.pop %v553
          %v555 = vmul.f32 %v554, 0.6931472
          %v556 = vadd.f32 %v552, %v555
          %v557 = vld [vmem:[#allocation4] sm:$0x3]
          %v558 = vsub.f32 %v557, %v556
          %v559 = vsel %vm439, %v558, 0.0
          %560 = vadd.xlane.f32.xlu0 %v559
          %v561 = vpop.xlane.xlu0 %560
          %v562 = vrot.slane %v561, 4
          %v563 = vadd.f32 %v561, %v562
          %v564 = vrot.slane %v563, 2
          %v565 = vadd.f32 %v563, %v564
          %v566 = vrot.slane %v565, 1
          %v567 = vadd.f32 %v565, %v566
          %s568 = vtos %v567
          %s569 = smul.f32 %s568, 0.5
          %s570 = sadd.f32 %s569, 0.0
          %v571 = vld [vmem:[%s457] sm:$0x3]
          %v572 = vld [vmem:[%s463] sm:$0x3]
          %v573 = vlog2.pop %v572
          %v574 = vmul.f32 %v573, 0.6931472
          %v575 = vadd.f32 %v571, %v574
          %v576 = vld [vmem:[%s482] sm:$0x3]
          %v577 = vsub.f32 %v576, %v575
          %v578 = vsel %vm439, %v577, 0.0
          %579 = vadd.xlane.f32.xlu0 %v578
          %v580 = vpop.xlane.xlu0 %579
          %v581 = vrot.slane %v580, 4
          %v582 = vadd.f32 %v580, %v581
          %v583 = vrot.slane %v582, 2
          %v584 = vadd.f32 %v582, %v583
          %v585 = vrot.slane %v584, 1
          %v586 = vadd.f32 %v584, %v585
          %s587 = vtos %v586
          %s588 = smul.f32 %s587, 0.5
          %s589 = sadd.f32 %s570, %s588
          %v590 = vld [vmem:[%s493] sm:$0x3]
          %v591 = vld [vmem:[%s499] sm:$0x3]
          %v592 = vlog2.pop %v591
          %v593 = vmul.f32 %v592, 0.6931472
          %v594 = vadd.f32 %v590, %v593
          %v595 = vld [vmem:[%s518] sm:$0x3]
          %v596 = vsub.f32 %v595, %v594
          %v597 = vsel %vm439, %v596, 0.0
          %598 = vadd.xlane.f32.xlu0 %v597
          %v599 = vpop.xlane.xlu0 %598
          %v600 = vrot.slane %v599, 4
          %v601 = vadd.f32 %v599, %v600
          %v602 = vrot.slane %v601, 2
          %v603 = vadd.f32 %v601, %v602
          %v604 = vrot.slane %v603, 1
          %v605 = vadd.f32 %v603, %v604
          %s606 = vtos %v605
          %s607 = smul.f32 %s606, 0.5
          %s608 = sadd.f32 %s589, %s607
          %s609 = smul.f32 %s551, 3.0
          %s610 = ssub.f32 %s609, %s608
          %s611 = scalar_lea.smem [#allocation9], 0
          %612 = sst [smem:[%s611]] %s550
          %s613 = scalar_lea.smem [#allocation10], 0
          %614 = sst [smem:[%s613]] %s610
          %s615 = sadd.f32 %s550, %s610
          %s616 = scalar_lea.smem [#allocation12], 0
          %617 = sst [smem:[%s616]] %s615
        $region64: #{tpu_custom_call.1} parent=51 // pred_fallthru
          _
        // Predicated region
        $region65: #{tpu_custom_call.1} parent=51 // pred_check
          %p618 = pneg %p229
        $region66: #{tpu_custom_call.1} parent=51 // pred_check_branch
          %620 = sbr.rel (%p618) target = $region68
        $region67: #{tpu_custom_call.1} parent=51 // pred_region
          %s622 = ssub.s32 16, 16
          %623 = vsyncadd [#allocation8], %s622
          %626 = dma.smem_to_hbm [#allocation9], 16, %s8, [#allocation8]
        $region68: #{tpu_custom_call.1} parent=51 // pred_fallthru
          _
        // Predicated region
        $region69: #{tpu_custom_call.1} parent=51 // pred_check
          %p627 = pneg %p250
        $region70: #{tpu_custom_call.1} parent=51 // pred_check_branch
          %629 = sbr.rel (%p627) target = $region72
        $region71: #{tpu_custom_call.1} parent=51 // pred_region
          %s631 = ssub.s32 16, 16
          %632 = vsyncadd [#allocation11], %s631
          %635 = dma.smem_to_hbm [#allocation10], 16, %s9, [#allocation11]
        $region72: #{tpu_custom_call.1} parent=51 // pred_fallthru
          _
        // Predicated region
        $region73: #{tpu_custom_call.1} parent=51 // pred_check
          %p636 = pneg %p271
        $region74: #{tpu_custom_call.1} parent=51 // pred_check_branch
          %638 = sbr.rel (%p636) target = $region76
        $region75: #{tpu_custom_call.1} parent=51 // pred_region
          %s640 = ssub.s32 16, 16
          %641 = vsyncadd [#allocation11], %s640
          %644 = dma.smem_to_hbm [#allocation12], 16, %s10, [#allocation11]
        $region76: #{tpu_custom_call.1} parent=51 // pred_fallthru
          _
        // Predicated region
        $region77: #{tpu_custom_call.1} parent=51 // pred_check
          %p645 = pneg %p229
        $region78: #{tpu_custom_call.1} parent=51 // pred_check_branch
          %647 = sbr.rel (%p645) target = $region80
        $region79: #{tpu_custom_call.1} parent=51 // pred_region
          %648 = dma.done [#allocation8], 16
        $region80: #{tpu_custom_call.1} parent=51 // pred_fallthru
          _
        // Predicated region
        $region81: #{tpu_custom_call.1} parent=51 // pred_check
          %p649 = pneg %p250
        $region82: #{tpu_custom_call.1} parent=51 // pred_check_branch
          %651 = sbr.rel (%p649) target = $region84
        $region83: #{tpu_custom_call.1} parent=51 // pred_region
          %652 = dma.done [#allocation11], 16
        $region84: #{tpu_custom_call.1} parent=51 // pred_fallthru
          _
        // Predicated region
        $region85: #{tpu_custom_call.1} parent=51 // pred_check
          %p653 = pneg %p271
        $region86: #{tpu_custom_call.1} parent=51 // pred_check_branch
          %655 = sbr.rel (%p653) target = $region88
        $region87: #{tpu_custom_call.1} parent=51 // pred_region
          %656 = dma.done [#allocation11], 16
        $region88: #{tpu_custom_call.1} parent=51 // pred_fallthru
          _
        %657 = sfence
      $region52: #{tpu_custom_call.1} parent=5 // pred_fallthru
        _
      %p658 = scmp.le.s32.totalorder 2, %s23
      // Predicated region
      $region89: #{tpu_custom_call.1} parent=5 // pred_check
        %p659 = pneg %p658
      $region90: #{tpu_custom_call.1} parent=5 // pred_check_branch
        %661 = sbr.rel (%p659) target = $region92
      $region91: #{tpu_custom_call.1} parent=5 // pred_region
        %s662 = ssub.s32 %s23, 2
      $region92: #{tpu_custom_call.1} parent=5 // pred_fallthru
        _
    $region6: #{tpu_custom_call.1} parent=1 // loop_footer
      %s27 = sadd.s32 1, %s23
    $region7: #{tpu_custom_call.1} parent=1 // loop_footer_branch
      %22 = sbr.rel target = $region3
    $region8: #{tpu_custom_call.1} parent=1 // loop_exit
      _
    %663 = vsyncpa [#allocation7], 1
    %s664 = scalar_lea.sflag [#allocation7], 1
    %665 = vsyncpa %s664, 1
    %666 = vsyncpa [#allocation8], 1
    %s667 = scalar_lea.sflag [#allocation8], 1
    %668 = vsyncpa %s667, 1
    %669 = vsyncpa [#allocation11], 1

</llo_original>
